<compile_context>
chip_gen: v6e
topology: v6e:2x2x1
jax: 0.10.0
libtpu: 0.0.40
codegen_flags: <defaults>
</compile_context>

<pallas_src>
import jax
import jax.numpy as jnp
from jax.experimental import pallas as pl
from jax.experimental.pallas import tpu as pltpu  # noqa: F401

# ---------------- model dims ----------------
B, C_IN, H, W = 2, 4, 16, 16          # input x: [B, C_IN, H, W] (NCHW at the API boundary)
C_FEAT = 32                           # base_cnn.out_features
HID = 256                             # projector hidden
PROJ = 128                            # projection_dim
KH = KW = 3                           # conv kernel
K_IM2COL = KH * KW * C_IN             # 36
K_AUG = K_IM2COL + 1                  # 37 (extra ones-row folds the conv bias into the matmul)
ROWS = H * W                          # 256 spatial positions per image
M = B * ROWS                          # 512


# ============================ Fused kernel ============================
def fused_kernel(pT_ref, wcT_ref, w1_ref, w2_ref, b12_ref, o_ref):
    # Conv (+ bias via the ones-row) as ONE transposed, lane-dense im2col matmul:
    # (32, 37) @ (37, 512) -> (32, 512); f32 accumulation on the MXU.
    yT = jnp.dot(wcT_ref[...], pT_ref[...], preferred_element_type=jnp.float32)
    yT = jnp.maximum(yT, 0.0)                                   # ReLU on dense vregs

    # Global average pool: one fused lane-axis reduce per (channel, image), then a tiny
    # (C_FEAT, B) -> (B, C_FEAT) transpose.  Features never touch HBM.
    featsT = jnp.mean(yT.reshape(C_FEAT, B, ROWS), axis=-1)     # (32, B)
    feats = featsT.T                                            # (B, 32)

    # Projector MLP.  Both Linear biases live in one packed operand; slices at 128-aligned lanes.
    b1 = b12_ref[:, :HID]                                       # (1, 256)
    b2 = b12_ref[:, HID:]                                       # (1, 128)
    h = jnp.maximum(jnp.dot(feats, w1_ref[...], preferred_element_type=jnp.float32) + b1, 0.0)
    z = jnp.dot(h, w2_ref[...], preferred_element_type=jnp.float32) + b2   # (B, 128) lane-dense

    # F.normalize(dim=1, eps=1e-12): z / max(||z||, eps) == z * rsqrt(max(sum(z^2), eps^2)).
    ssq = jnp.sum(z * z, axis=1, keepdims=True)
    o_ref[...] = z * jax.lax.rsqrt(jnp.maximum(ssq, 1e-24))


def _pallas_forward(pT, wcT, w1, w2, b12):
    # Whole-array, single-invocation pallas_call: no grid, no index maps, no double-buffering
    # (there is nothing to pipeline at this size).
    return pl.pallas_call(
        fused_kernel,
        out_shape=jax.ShapeDtypeStruct((B, PROJ), jnp.float32),
    )(pT, wcT, w1, w2, b12)


# ============================ Full forward ============================
@jax.jit
def contrastive_cnn_forward(x_nchw, params):
    # Single pre-kernel XLA fusion that emits im2col patches DIRECTLY in the transposed
    # (K_AUG, B*H*W) layout the kernel wants: K on sublanes, the long 512 axis on lanes.
    x = jnp.transpose(x_nchw, (0, 2, 3, 1))                     # NHWC
    x = jnp.pad(x, ((0, 0), (1, 1), (1, 1), (0, 0)))            # 'same' padding
    rows = [jnp.transpose(x[:, kh:kh + H, kw:kw + W, :], (3, 0, 1, 2)).reshape(C_IN, M)
            for kh in range(KH) for kw in range(KW)]
    pT = jnp.concatenate(rows + [jnp.ones((1, M), jnp.float32)], axis=0)    # (37, 512)

    # Tiny weight prep (fused by XLA): HWIO conv weight -> (C_FEAT, K) with the bias as
    # column 36; the two Linear biases packed into one (1, HID+PROJ) lane-dense operand.
    wcT = jnp.concatenate(
        [params["conv_w"].reshape(K_IM2COL, C_FEAT).T,
         params["conv_b"].reshape(C_FEAT, 1)], axis=1)                      # (32, 37)
    b12 = jnp.concatenate([params["b1"], params["b2"]]).reshape(1, HID + PROJ)

    # TODO(synk): for realistic contrastive batches (B >= 128) add a grid over the M = B*H*W
    # axis with a pooled-accumulator VMEM scratch ("parallel" batch axis for v7x's 2 cores)
    # instead of one whole-array block, to stay inside v7x/v5e VMEM.
    return _pallas_forward(pT, wcT, params["w1"], params["w2"], b12)


@jax.jit
def reference_forward(x_nchw, params):
    """Pure-JAX reference with identical semantics (for verification)."""
    x_nhwc = jnp.transpose(x_nchw, (0, 2, 3, 1))
    y = jax.lax.conv_general_dilated(
        x_nhwc, params["conv_w"], window_strides=(1, 1), padding="SAME",
        dimension_numbers=("NHWC", "HWIO", "NHWC"))
    y = jnp.maximum(y + params["conv_b"], 0.0)
    feats = jnp.mean(y, axis=(1, 2))
    h = jnp.maximum(feats @ params["w1"] + params["b1"], 0.0)
    z = h @ params["w2"] + params["b2"]
    return z / jnp.maximum(jnp.linalg.norm(z, axis=1, keepdims=True), 1e-12)


if __name__ == "__main__":
    key = jax.random.PRNGKey(0)
    kx, k1, k2, k3, k4, k5, k6 = jax.random.split(key, 7)

    x = jax.random.normal(kx, (B, C_IN, H, W), dtype=jnp.float32)

    params = {
        "conv_w": jax.random.normal(k1, (KH, KW, C_IN, C_FEAT), jnp.float32) * 0.1,
        "conv_b": jax.random.normal(k2, (C_FEAT,), jnp.float32) * 0.01,
        "w1": jax.random.normal(k3, (C_FEAT, HID), jnp.float32) * (1.0 / jnp.sqrt(C_FEAT)),
        "b1": jax.random.normal(k4, (HID,), jnp.float32) * 0.01,
        "w2": jax.random.normal(k5, (HID, PROJ), jnp.float32) * (1.0 / jnp.sqrt(HID)),
        "b2": jax.random.normal(k6, (PROJ,), jnp.float32) * 0.01,
    }

    out = jax.block_until_ready(contrastive_cnn_forward(x, params))
    ref = jax.block_until_ready(reference_forward(x, params))

    assert out.shape == (B, PROJ)
    assert jnp.allclose(out, ref, atol=1e-4, rtol=1e-4), "mismatch vs reference"
    # every row of the projection must be unit-norm
    assert jnp.allclose(jnp.linalg.norm(out, axis=1), 1.0, atol=1e-5)

    print("KERNEL_OK")
</pallas_src>

<mosaic_0001>
module attributes {stable_mosaic.version = 11 : i64} {
  func.func @fused_kernel(%arg0: memref<37x512xf32, #tpu.memory_space<vmem>>, %arg1: memref<32x37xf32, #tpu.memory_space<vmem>>, %arg2: memref<32x256xf32, #tpu.memory_space<vmem>>, %arg3: memref<256x128xf32, #tpu.memory_space<vmem>>, %arg4: memref<1x384xf32, #tpu.memory_space<vmem>>, %arg5: memref<2x128xf32, #tpu.memory_space<vmem>>) attributes {dimension_semantics = [], scalar_prefetch = 0 : i64, scratch_operands = 0 : i64, tpu.core_type = #tpu.core_type<tc>} {
    %c0 = arith.constant 0 : index
    %c0_0 = arith.constant 0 : index
    %0 = vector.load %arg1[%c0, %c0_0] : memref<32x37xf32, #tpu.memory_space<vmem>>, vector<32x37xf32>
    %c0_1 = arith.constant 0 : index
    %c0_2 = arith.constant 0 : index
    %1 = vector.load %arg0[%c0_1, %c0_2] : memref<37x512xf32, #tpu.memory_space<vmem>>, vector<37x512xf32>
    %cst = arith.constant dense<0.000000e+00> : vector<32x512xf32>
    %2 = tpu.matmul %0, %1, %cst {dimension_numbers = #tpu.dot_dimension_numbers<[1], [0], [0], [1], [0, 0, 1, 1], [], []>} : vector<32x37xf32>, vector<37x512xf32>, vector<32x512xf32> -> vector<32x512xf32>
    %cst_3 = arith.constant 0.000000e+00 : f32
    %3 = vector.broadcast %cst_3 : f32 to vector<32x512xf32>
    %4 = arith.maximumf %2, %3 : vector<32x512xf32>
    %5 = vector.shape_cast %4 : vector<32x512xf32> to vector<32x2x256xf32>
    %cst_4 = arith.constant dense<0.000000e+00> : vector<32x2xf32>
    %6 = vector.multi_reduction <add>, %5, %cst_4 [2] : vector<32x2x256xf32> to vector<32x2xf32>
    %cst_5 = arith.constant 2.560000e+02 : f32
    %7 = vector.broadcast %cst_5 : f32 to vector<32x2xf32>
    %8 = arith.divf %6, %7 : vector<32x2xf32>
    %9 = tpu.transpose %8, [1, 0] : vector<32x2xf32> -> vector<2x32xf32>
    %c0_6 = arith.constant 0 : index
    %c0_7 = arith.constant 0 : index
    %10 = vector.load %arg4[%c0_6, %c0_7] : memref<1x384xf32, #tpu.memory_space<vmem>>, vector<1x256xf32>
    %c0_8 = arith.constant 0 : index
    %c256 = arith.constant 256 : index
    %11 = vector.load %arg4[%c0_8, %c256] : memref<1x384xf32, #tpu.memory_space<vmem>>, vector<1x128xf32>
    %c0_9 = arith.constant 0 : index
    %c0_10 = arith.constant 0 : index
    %12 = vector.load %arg2[%c0_9, %c0_10] : memref<32x256xf32, #tpu.memory_space<vmem>>, vector<32x256xf32>
    %cst_11 = arith.constant dense<0.000000e+00> : vector<2x256xf32>
    %13 = tpu.matmul %9, %12, %cst_11 {dimension_numbers = #tpu.dot_dimension_numbers<[1], [0], [0], [1], [0, 0, 1, 1], [], []>} : vector<2x32xf32>, vector<32x256xf32>, vector<2x256xf32> -> vector<2x256xf32>
    %14 = vector.broadcast %10 : vector<1x256xf32> to vector<2x256xf32>
    %15 = arith.addf %13, %14 : vector<2x256xf32>
    %cst_12 = arith.constant 0.000000e+00 : f32
    %16 = vector.broadcast %cst_12 : f32 to vector<2x256xf32>
    %17 = arith.maximumf %15, %16 : vector<2x256xf32>
    %c0_13 = arith.constant 0 : index
    %c0_14 = arith.constant 0 : index
    %18 = vector.load %arg3[%c0_13, %c0_14] : memref<256x128xf32, #tpu.memory_space<vmem>>, vector<256x128xf32>
    %cst_15 = arith.constant dense<0.000000e+00> : vector<2x128xf32>
    %19 = tpu.matmul %17, %18, %cst_15 {dimension_numbers = #tpu.dot_dimension_numbers<[1], [0], [0], [1], [0, 0, 1, 1], [], []>} : vector<2x256xf32>, vector<256x128xf32>, vector<2x128xf32> -> vector<2x128xf32>
    %20 = vector.broadcast %11 : vector<1x128xf32> to vector<2x128xf32>
    %21 = arith.addf %19, %20 : vector<2x128xf32>
    %22 = arith.mulf %21, %21 : vector<2x128xf32>
    %cst_16 = arith.constant dense<0.000000e+00> : vector<2xf32>
    %23 = vector.multi_reduction <add>, %22, %cst_16 [1] : vector<2x128xf32> to vector<2xf32>
    %24 = vector.shape_cast %23 : vector<2xf32> to vector<2x1xf32>
    %cst_17 = arith.constant 1.000000e-24 : f32
    %25 = vector.broadcast %cst_17 : f32 to vector<2x1xf32>
    %26 = arith.maximumf %24, %25 : vector<2x1xf32>
    %27 = math.rsqrt %26 : vector<2x1xf32>
    %28 = vector.broadcast %27 : vector<2x1xf32> to vector<2x128xf32>
    %29 = arith.mulf %21, %28 : vector<2x128xf32>
    %c0_18 = arith.constant 0 : index
    %c0_19 = arith.constant 0 : index
    %30 = vector.load %arg5[%c0_18, %c0_19] : memref<2x128xf32, #tpu.memory_space<vmem>>, vector<2x128xf32>
    tpu.vector_store %arg5[%c0_18, %c0_19], %29 {strides = array<i32>} : memref<2x128xf32, #tpu.memory_space<vmem>>, vector<2x128xf32>,
    return
  }
}

</mosaic_0001>

<llo_original>
// kernel: contrastive_cnn_forward.1
$region0: #{contrastive_cnn_forward.1}
  #allocation0 [shape = 'u32[]', space=smem, size = 0x4, offset = 0x4, fixed_abs, tag = 'smem constant byte address 0x4 - core index']
  #allocation1 [shape = 'u32[144,128]{1,0:T(1,128)}', space=vmem, size = 0x12000, scoped, tag = 'internal scratch']
  %s0 = inlined_call_operand.vmem [shape: f32[37,512], index: 0, kind: input, shape index: {}]
  %s1 = inlined_call_operand.vmem [shape: f32[32,37], index: 1, kind: input, shape index: {}]
  %s2 = inlined_call_operand.vmem [shape: f32[32,256], index: 2, kind: input, shape index: {}]
  %s3 = inlined_call_operand.vmem [shape: f32[256,128], index: 3, kind: input, shape index: {}]
  %s4 = inlined_call_operand.vmem [shape: f32[1,384], index: 4, kind: input, shape index: {}]
  %s5 = inlined_call_operand.hbm [shape: f32[2,128], index: 5, kind: output, shape index: {}]
  %s6 = sld [smem:[#allocation0]]
  $region30: #{contrastive_cnn_forward.1} parent=0
    _
  %s8 = ssub.s32 1, %s6
  %s9 = scalar_select 0, %s8, %s6
  $region1: #{contrastive_cnn_forward.1} parent=0
    #allocation2 [shape = 'u8[1024]{0}', space=vmem, size = 0x400, scoped, tag = 'output window, operand 0, single buffered']
    #allocation3 [shape = 's32[1]{0}', space=sflag, size = 0x4, scoped, tag = 'scoped memory for contrastive_cnn_forward.1']
    %10 = vsyncpa [#allocation3], 0
    // Predicated region
    $region2: #{contrastive_cnn_forward.1} parent=1 // pred_check
      _
    $region3: #{contrastive_cnn_forward.1} parent=1 // pred_check_branch
      %12 = sbr.rel (0) target = $region5
    $region4: #{contrastive_cnn_forward.1} parent=1 // pred_region
      _
    $region5: #{contrastive_cnn_forward.1} parent=1 // pred_fallthru
      _
    // Predicated region
    $region6: #{contrastive_cnn_forward.1} parent=1 // pred_check
      _
    $region7: #{contrastive_cnn_forward.1} parent=1 // pred_check_branch
      %14 = sbr.rel (0) target = $region9
    $region8: #{contrastive_cnn_forward.1} parent=1 // pred_region
      _
    $region9: #{contrastive_cnn_forward.1} parent=1 // pred_fallthru
      _
    // Predicated region
    $region10: #{contrastive_cnn_forward.1} parent=1 // pred_check
      _
    $region11: #{contrastive_cnn_forward.1} parent=1 // pred_check_branch
      %16 = sbr.rel (0) target = $region13
    $region12: #{contrastive_cnn_forward.1} parent=1 // pred_region
      _
    $region13: #{contrastive_cnn_forward.1} parent=1 // pred_fallthru
      _
    // Predicated region
    $region14: #{contrastive_cnn_forward.1} parent=1 // pred_check
      _
    $region15: #{contrastive_cnn_forward.1} parent=1 // pred_check_branch
      %18 = sbr.rel (0) target = $region17
    $region16: #{contrastive_cnn_forward.1} parent=1 // pred_region
      _
    $region17: #{contrastive_cnn_forward.1} parent=1 // pred_fallthru
      _
    // Predicated region
    $region18: #{contrastive_cnn_forward.1} parent=1 // pred_check
      _
    $region19: #{contrastive_cnn_forward.1} parent=1 // pred_check_branch
      %20 = sbr.rel (0) target = $region21
    $region20: #{contrastive_cnn_forward.1} parent=1 // pred_region
      _
    $region21: #{contrastive_cnn_forward.1} parent=1 // pred_fallthru
      _
    %v21 = vld [vmem:[%s1] sm:$0xff]
    %v22 = vld [vmem:[%s1 + $0x8] sm:$0xff]
    %v23 = vld [vmem:[%s1 + $0x10] sm:$0xff]
    %v24 = vld [vmem:[%s1 + $0x18] sm:$0xff]
    %v25 = vld [vmem:[%s0] sm:$0xff]
    %v26 = vld [vmem:[%s0 + $0x8] sm:$0xff]
    %v27 = vld [vmem:[%s0 + $0x10] sm:$0xff]
    %v28 = vld [vmem:[%s0 + $0x18] sm:$0xff]
    %v29 = vld [vmem:[%s0 + $0x20] sm:$0xff]
    %v30 = vld [vmem:[%s0 + $0x28] sm:$0xff]
    %v31 = vld [vmem:[%s0 + $0x30] sm:$0xff]
    %v32 = vld [vmem:[%s0 + $0x38] sm:$0xff]
    %v33 = vld [vmem:[%s0 + $0x40] sm:$0xff]
    %v34 = vld [vmem:[%s0 + $0x48] sm:$0xff]
    %v35 = vld [vmem:[%s0 + $0x50] sm:$0xff]
    %v36 = vld [vmem:[%s0 + $0x58] sm:$0xff]
    %v37 = vld [vmem:[%s0 + $0x60] sm:$0xff]
    %v38 = vld [vmem:[%s0 + $0x68] sm:$0xff]
    %v39 = vld [vmem:[%s0 + $0x70] sm:$0xff]
    %v40 = vld [vmem:[%s0 + $0x78] sm:$0xff]
    %v41 = vld [vmem:[%s0 + $0x80] sm:$0x1f]
    %v42 = vld [vmem:[%s0 + $0x88] sm:$0x1f]
    %v43 = vld [vmem:[%s0 + $0x90] sm:$0x1f]
    %v44 = vld [vmem:[%s0 + $0x98] sm:$0x1f]
    %vm45 = vcmask 302080
    %v47 = vsel %vm45, %v21, 0
    %v50 = vsel %vm45, %v22, 0
    %v53 = vsel %vm45, %v23, 0
    %v56 = vsel %vm45, %v24, 0
    %vm58 = vcmask 1044480
    %v60 = vsel %vm58, %v41, 0
    %v63 = vsel %vm58, %v42, 0
    %v66 = vsel %vm58, %v43, 0
    %v69 = vsel %vm58, %v44, 0
    %71 = vmatprep.subr.mxu0 0.0
    %72 = vmatpush1.msra.mxu0 0.0
    %73 = vmatprep.subr.mxu0 0.0
    %74 = vmatpush1.msra.mxu0 0.0
    %75 = vmatprep.subr.mxu0 0.0
    %76 = vmatpush1.msra.mxu0 0.0
    %77 = vmatprep.subr.mxu0 0.0
    %78 = vmatpush1.msra.mxu0 0.0
    %79 = vmatprep.subr.mxu0 0.0
    %80 = vmatpush1.msra.mxu0 0.0
    %81 = vmatprep.subr.mxu0 0.0
    %82 = vmatpush1.msra.mxu0 0.0
    %83 = vmatprep.subr.mxu0 0.0
    %84 = vmatpush1.msra.mxu0 0.0
    %85 = vmatprep.subr.mxu0 0.0
    %86 = vmatpush1.msra.mxu0 0.0
    %87 = vmatprep.subr.mxu0 0.0
    %88 = vmatpush1.msra.mxu0 0.0
    %89 = vmatprep.subr.mxu0 0.0
    %90 = vmatpush1.msra.mxu0 0.0
    %91 = vmatprep.subr.mxu0 0.0
    %92 = vmatpush1.msra.mxu0 0.0
    %93 = vmatprep.subr.mxu0 %v63
    %94 = vmatpush1.msra.mxu0 %v60
    %95 = vmatprep.subr.mxu0 %v38
    %96 = vmatpush1.msra.mxu0 %v37
    %97 = vmatprep.subr.mxu0 %v34
    %98 = vmatpush1.msra.mxu0 %v33
    %99 = vmatprep.subr.mxu0 %v30
    %100 = vmatpush1.msra.mxu0 %v29
    %101 = vmatprep.subr.mxu0 %v26
    %102 = vmatpush1.msra.mxu0 %v25
    %103 = vmatprep.subr.mxu0 0.0
    %104 = vmatpush2.msra.mxu0 0.0
    %105 = vmatprep.subr.mxu0 0.0
    %106 = vmatpush2.msra.mxu0 0.0
    %107 = vmatprep.subr.mxu0 0.0
    %108 = vmatpush2.msra.mxu0 0.0
    %109 = vmatprep.subr.mxu0 0.0
    %110 = vmatpush2.msra.mxu0 0.0
    %111 = vmatprep.subr.mxu0 0.0
    %112 = vmatpush2.msra.mxu0 0.0
    %113 = vmatprep.subr.mxu0 0.0
    %114 = vmatpush2.msra.mxu0 0.0
    %115 = vmatprep.subr.mxu0 0.0
    %116 = vmatpush2.msra.mxu0 0.0
    %117 = vmatprep.subr.mxu0 0.0
    %118 = vmatpush2.msra.mxu0 0.0
    %119 = vmatprep.subr.mxu0 0.0
    %120 = vmatpush2.msra.mxu0 0.0
    %121 = vmatprep.subr.mxu0 0.0
    %122 = vmatpush2.msra.mxu0 0.0
    %123 = vmatprep.subr.mxu0 0.0
    %124 = vmatpush2.msra.mxu0 0.0
    %125 = vmatprep.subr.mxu0 0.0
    %126 = vmatpush2.msra.mxu0 0.0
    %127 = vmatprep.subr.mxu0 0.0
    %128 = vmatpush2.msra.mxu0 0.0
    %129 = vmatprep.subr.mxu0 0.0
    %130 = vmatpush2.msra.mxu0 0.0
    %131 = vmatprep.subr.mxu0 0.0
    %132 = vmatpush2.msra.mxu0 0.0
    %133 = vmatprep.subr.mxu0 0.0
    %134 = vmatpush2.msra.mxu0 0.0
    %135 = vmatprep.mubr.f32.mxu0 0.0
    %136 = vmatmul.mubr.f32.gmra.mxu0 %v47
    %v137 = vpop.f32.mrf.mxu0
    %v138 = vadd.f32 0.0, %v137
    %v139 = vpop.f32.mrf.mxu0
    %v140 = vadd.f32 0.0, %v139
    %141 = vmatprep.mubr.f32.mxu0 0.0
    %142 = vmatmul.mubr.f32.gmra.mxu0 %v50
    %v143 = vpop.f32.mrf.mxu0
    %v144 = vadd.f32 0.0, %v143
    %v145 = vpop.f32.mrf.mxu0
    %v146 = vadd.f32 0.0, %v145
    %147 = vmatprep.mubr.f32.mxu0 0.0
    %148 = vmatmul.mubr.f32.gmra.mxu0 %v53
    %v149 = vpop.f32.mrf.mxu0
    %v150 = vadd.f32 0.0, %v149
    %v151 = vpop.f32.mrf.mxu0
    %v152 = vadd.f32 0.0, %v151
    %153 = vmatprep.mubr.f32.mxu0 0.0
    %154 = vmatmul.mubr.f32.gmra.mxu0 %v56
    %v155 = vpop.f32.mrf.mxu0
    %v156 = vadd.f32 0.0, %v155
    %v157 = vpop.f32.mrf.mxu0
    %v158 = vadd.f32 0.0, %v157
    %159 = vdwg.mxu0
    %160 = vmatprep.subr.mxu0 0.0
    %161 = vmatpush1.msra.mxu0 0.0
    %162 = vmatprep.subr.mxu0 0.0
    %163 = vmatpush1.msra.mxu0 0.0
    %164 = vmatprep.subr.mxu0 0.0
    %165 = vmatpush1.msra.mxu0 0.0
    %166 = vmatprep.subr.mxu0 0.0
    %167 = vmatpush1.msra.mxu0 0.0
    %168 = vmatprep.subr.mxu0 0.0
    %169 = vmatpush1.msra.mxu0 0.0
    %170 = vmatprep.subr.mxu0 0.0
    %171 = vmatpush1.msra.mxu0 0.0
    %172 = vmatprep.subr.mxu0 0.0
    %173 = vmatpush1.msra.mxu0 0.0
    %174 = vmatprep.subr.mxu0 0.0
    %175 = vmatpush1.msra.mxu0 0.0
    %176 = vmatprep.subr.mxu0 0.0
    %177 = vmatpush1.msra.mxu0 0.0
    %178 = vmatprep.subr.mxu0 0.0
    %179 = vmatpush1.msra.mxu0 0.0
    %180 = vmatprep.subr.mxu0 0.0
    %181 = vmatpush1.msra.mxu0 0.0
    %182 = vmatprep.subr.mxu0 %v69
    %183 = vmatpush1.msra.mxu0 %v66
    %184 = vmatprep.subr.mxu0 %v40
    %185 = vmatpush1.msra.mxu0 %v39
    %186 = vmatprep.subr.mxu0 %v36
    %187 = vmatpush1.msra.mxu0 %v35
    %188 = vmatprep.subr.mxu0 %v32
    %189 = vmatpush1.msra.mxu0 %v31
    %190 = vmatprep.subr.mxu0 %v28
    %191 = vmatpush1.msra.mxu0 %v27
    %192 = vmatprep.subr.mxu0 0.0
    %193 = vmatpush2.msra.mxu0 0.0
    %194 = vmatprep.subr.mxu0 0.0
    %195 = vmatpush2.msra.mxu0 0.0
    %196 = vmatprep.subr.mxu0 0.0
    %197 = vmatpush2.msra.mxu0 0.0
    %198 = vmatprep.subr.mxu0 0.0
    %199 = vmatpush2.msra.mxu0 0.0
    %200 = vmatprep.subr.mxu0 0.0
    %201 = vmatpush2.msra.mxu0 0.0
    %202 = vmatprep.subr.mxu0 0.0
    %203 = vmatpush2.msra.mxu0 0.0
    %204 = vmatprep.subr.mxu0 0.0
    %205 = vmatpush2.msra.mxu0 0.0
    %206 = vmatprep.subr.mxu0 0.0
    %207 = vmatpush2.msra.mxu0 0.0
    %208 = vmatprep.subr.mxu0 0.0
    %209 = vmatpush2.msra.mxu0 0.0
    %210 = vmatprep.subr.mxu0 0.0
    %211 = vmatpush2.msra.mxu0 0.0
    %212 = vmatprep.subr.mxu0 0.0
    %213 = vmatpush2.msra.mxu0 0.0
    %214 = vmatprep.subr.mxu0 0.0
    %215 = vmatpush2.msra.mxu0 0.0
    %216 = vmatprep.subr.mxu0 0.0
    %217 = vmatpush2.msra.mxu0 0.0
    %218 = vmatprep.subr.mxu0 0.0
    %219 = vmatpush2.msra.mxu0 0.0
    %220 = vmatprep.subr.mxu0 0.0
    %221 = vmatpush2.msra.mxu0 0.0
    %222 = vmatprep.subr.mxu0 0.0
    %223 = vmatpush2.msra.mxu0 0.0
    %224 = vmatprep.mubr.f32.mxu0 0.0
    %225 = vmatmul.mubr.f32.gmra.mxu0 %v47
    %v226 = vpop.f32.mrf.mxu0
    %v227 = vadd.f32 0.0, %v226
    %v228 = vpop.f32.mrf.mxu0
    %v229 = vadd.f32 0.0, %v228
    %230 = vmatprep.mubr.f32.mxu0 0.0
    %231 = vmatmul.mubr.f32.gmra.mxu0 %v50
    %v232 = vpop.f32.mrf.mxu0
    %v233 = vadd.f32 0.0, %v232
    %v234 = vpop.f32.mrf.mxu0
    %v235 = vadd.f32 0.0, %v234
    %236 = vmatprep.mubr.f32.mxu0 0.0
    %237 = vmatmul.mubr.f32.gmra.mxu0 %v53
    %v238 = vpop.f32.mrf.mxu0
    %v239 = vadd.f32 0.0, %v238
    %v240 = vpop.f32.mrf.mxu0
    %v241 = vadd.f32 0.0, %v240
    %242 = vmatprep.mubr.f32.mxu0 0.0
    %243 = vmatmul.mubr.f32.gmra.mxu0 %v56
    %v244 = vpop.f32.mrf.mxu0
    %v245 = vadd.f32 0.0, %v244
    %v246 = vpop.f32.mrf.mxu0
    %v247 = vadd.f32 0.0, %v246
    %248 = vdwg.mxu0
    %v249 = vmax.f32 %v138, 0.0
    %v250 = vmax.f32 %v140, 0.0
    %v251 = vmax.f32 %v227, 0.0
    %v252 = vmax.f32 %v229, 0.0
    %v253 = vmax.f32 %v144, 0.0
    %v254 = vmax.f32 %v146, 0.0
    %v255 = vmax.f32 %v233, 0.0
    %v256 = vmax.f32 %v235, 0.0
    %v257 = vmax.f32 %v150, 0.0
    %v258 = vmax.f32 %v152, 0.0
    %v259 = vmax.f32 %v239, 0.0
    %v260 = vmax.f32 %v241, 0.0
    %v261 = vmax.f32 %v156, 0.0
    %v262 = vmax.f32 %v158, 0.0
    %v263 = vmax.f32 %v245, 0.0
    %v264 = vmax.f32 %v247, 0.0
    %v265 = vcombine.high %v249, 0.0
    %v267 = vunpack.c.l.s4 1983009808
    %v268 = vunpack.c.0.s8 %v267
    %v269 = vlaneseq
    %v270 = vshrl.u32 %v269, 7
    %v271 = vsub.s32 %v268, %v270
    %v272 = vrot.slane %v249, %v271
    %v274 = vunpack.c.l.s4 1983009808
    %v275 = vunpack.c.0.s8 %v274
    %v276 = vlaneseq
    %v277 = vshrl.u32 %v276, 7
    %v278 = vsub.s32 %v275, %v277
    %v279 = vrot.slane %v265, %v278
    %v280 = vcombine.high %v251, 0.0
    %v282 = vunpack.c.l.s4 1983009808
    %v283 = vunpack.c.0.s8 %v282
    %v284 = vlaneseq
    %v285 = vshrl.u32 %v284, 7
    %v286 = vsub.s32 %v283, %v285
    %v287 = vrot.slane %v251, %v286
    %v289 = vunpack.c.l.s4 1983009808
    %v290 = vunpack.c.0.s8 %v289
    %v291 = vlaneseq
    %v292 = vshrl.u32 %v291, 7
    %v293 = vsub.s32 %v290, %v292
    %v294 = vrot.slane %v280, %v293
    %v295 = vcombine.low %v272, %v287
    %v296 = vcombine.high %v272, %v287
    %v298 = vunpack.c.l.s4 1934713408
    %v299 = vunpack.c.0.s8 %v298
    %v300 = vlaneseq
    %v301 = vshrl.u32 %v300, 7
    %v302 = vsub.s32 %v299, %v301
    %v303 = vrot.slane %v295, %v302
    %v305 = vunpack.c.l.s4 1934713408
    %v306 = vunpack.c.0.s8 %v305
    %v307 = vlaneseq
    %v308 = vshrl.u32 %v307, 7
    %v309 = vsub.s32 %v306, %v308
    %v310 = vrot.slane %v296, %v309
    %v311 = vcombine.low %v279, %v294
    %v312 = vcombine.high %v279, %v294
    %v314 = vunpack.c.l.s4 1934713408
    %v315 = vunpack.c.0.s8 %v314
    %v316 = vlaneseq
    %v317 = vshrl.u32 %v316, 7
    %v318 = vsub.s32 %v315, %v317
    %v319 = vrot.slane %v311, %v318
    %v321 = vunpack.c.l.s4 1934713408
    %v322 = vunpack.c.0.s8 %v321
    %v323 = vlaneseq
    %v324 = vshrl.u32 %v323, 7
    %v325 = vsub.s32 %v322, %v324
    %v326 = vrot.slane %v312, %v325
    %v327 = vcombine.high %v303, 0.0
    %v328 = vcombine.high %v310, 0.0
    %v329 = vcombine.high %v319, 0.0
    %v330 = vcombine.high %v326, 0.0
    %v331 = vcombine.high %v253, 0.0
    %v333 = vunpack.c.l.s4 1983009808
    %v334 = vunpack.c.0.s8 %v333
    %v335 = vlaneseq
    %v336 = vshrl.u32 %v335, 7
    %v337 = vsub.s32 %v334, %v336
    %v338 = vrot.slane %v253, %v337
    %v340 = vunpack.c.l.s4 1983009808
    %v341 = vunpack.c.0.s8 %v340
    %v342 = vlaneseq
    %v343 = vshrl.u32 %v342, 7
    %v344 = vsub.s32 %v341, %v343
    %v345 = vrot.slane %v331, %v344
    %v346 = vcombine.high %v255, 0.0
    %v348 = vunpack.c.l.s4 1983009808
    %v349 = vunpack.c.0.s8 %v348
    %v350 = vlaneseq
    %v351 = vshrl.u32 %v350, 7
    %v352 = vsub.s32 %v349, %v351
    %v353 = vrot.slane %v255, %v352
    %v355 = vunpack.c.l.s4 1983009808
    %v356 = vunpack.c.0.s8 %v355
    %v357 = vlaneseq
    %v358 = vshrl.u32 %v357, 7
    %v359 = vsub.s32 %v356, %v358
    %v360 = vrot.slane %v346, %v359
    %v361 = vcombine.low %v338, %v353
    %v362 = vcombine.high %v338, %v353
    %v364 = vunpack.c.l.s4 1934713408
    %v365 = vunpack.c.0.s8 %v364
    %v366 = vlaneseq
    %v367 = vshrl.u32 %v366, 7
    %v368 = vsub.s32 %v365, %v367
    %v369 = vrot.slane %v361, %v368
    %v371 = vunpack.c.l.s4 1934713408
    %v372 = vunpack.c.0.s8 %v371
    %v373 = vlaneseq
    %v374 = vshrl.u32 %v373, 7
    %v375 = vsub.s32 %v372, %v374
    %v376 = vrot.slane %v362, %v375
    %v377 = vcombine.low %v345, %v360
    %v378 = vcombine.high %v345, %v360
    %v380 = vunpack.c.l.s4 1934713408
    %v381 = vunpack.c.0.s8 %v380
    %v382 = vlaneseq
    %v383 = vshrl.u32 %v382, 7
    %v384 = vsub.s32 %v381, %v383
    %v385 = vrot.slane %v377, %v384
    %v387 = vunpack.c.l.s4 1934713408
    %v388 = vunpack.c.0.s8 %v387
    %v389 = vlaneseq
    %v390 = vshrl.u32 %v389, 7
    %v391 = vsub.s32 %v388, %v390
    %v392 = vrot.slane %v378, %v391
    %v393 = vcombine.high %v369, 0.0
    %v394 = vcombine.high %v376, 0.0
    %v395 = vcombine.high %v385, 0.0
    %v396 = vcombine.high %v392, 0.0
    %v397 = vcombine.high %v257, 0.0
    %v399 = vunpack.c.l.s4 1983009808
    %v400 = vunpack.c.0.s8 %v399
    %v401 = vlaneseq
    %v402 = vshrl.u32 %v401, 7
    %v403 = vsub.s32 %v400, %v402
    %v404 = vrot.slane %v257, %v403
    %v406 = vunpack.c.l.s4 1983009808
    %v407 = vunpack.c.0.s8 %v406
    %v408 = vlaneseq
    %v409 = vshrl.u32 %v408, 7
    %v410 = vsub.s32 %v407, %v409
    %v411 = vrot.slane %v397, %v410
    %v412 = vcombine.high %v259, 0.0
    %v414 = vunpack.c.l.s4 1983009808
    %v415 = vunpack.c.0.s8 %v414
    %v416 = vlaneseq
    %v417 = vshrl.u32 %v416, 7
    %v418 = vsub.s32 %v415, %v417
    %v419 = vrot.slane %v259, %v418
    %v421 = vunpack.c.l.s4 1983009808
    %v422 = vunpack.c.0.s8 %v421
    %v423 = vlaneseq
    %v424 = vshrl.u32 %v423, 7
    %v425 = vsub.s32 %v422, %v424
    %v426 = vrot.slane %v412, %v425
    %v427 = vcombine.low %v404, %v419
    %v428 = vcombine.high %v404, %v419
    %v430 = vunpack.c.l.s4 1934713408
    %v431 = vunpack.c.0.s8 %v430
    %v432 = vlaneseq
    %v433 = vshrl.u32 %v432, 7
    %v434 = vsub.s32 %v431, %v433
    %v435 = vrot.slane %v427, %v434
    %v437 = vunpack.c.l.s4 1934713408
    %v438 = vunpack.c.0.s8 %v437
    %v439 = vlaneseq
    %v440 = vshrl.u32 %v439, 7
    %v441 = vsub.s32 %v438, %v440
    %v442 = vrot.slane %v428, %v441
    %v443 = vcombine.low %v411, %v426
    %v444 = vcombine.high %v411, %v426
    %v446 = vunpack.c.l.s4 1934713408
    %v447 = vunpack.c.0.s8 %v446
    %v448 = vlaneseq
    %v449 = vshrl.u32 %v448, 7
    %v450 = vsub.s32 %v447, %v449
    %v451 = vrot.slane %v443, %v450
    %v453 = vunpack.c.l.s4 1934713408
    %v454 = vunpack.c.0.s8 %v453
    %v455 = vlaneseq
    %v456 = vshrl.u32 %v455, 7
    %v457 = vsub.s32 %v454, %v456
    %v458 = vrot.slane %v444, %v457
    %v459 = vcombine.high %v435, 0.0
    %v460 = vcombine.high %v442, 0.0
    %v461 = vcombine.high %v451, 0.0
    %v462 = vcombine.high %v458, 0.0
    %v463 = vcombine.high %v261, 0.0
    %v465 = vunpack.c.l.s4 1983009808
    %v466 = vunpack.c.0.s8 %v465
    %v467 = vlaneseq
    %v468 = vshrl.u32 %v467, 7
    %v469 = vsub.s32 %v466, %v468
    %v470 = vrot.slane %v261, %v469
    %v472 = vunpack.c.l.s4 1983009808
    %v473 = vunpack.c.0.s8 %v472
    %v474 = vlaneseq
    %v475 = vshrl.u32 %v474, 7
    %v476 = vsub.s32 %v473, %v475
    %v477 = vrot.slane %v463, %v476
    %v478 = vcombine.high %v263, 0.0
    %v480 = vunpack.c.l.s4 1983009808
    %v481 = vunpack.c.0.s8 %v480
    %v482 = vlaneseq
    %v483 = vshrl.u32 %v482, 7
    %v484 = vsub.s32 %v481, %v483
    %v485 = vrot.slane %v263, %v484
    %v487 = vunpack.c.l.s4 1983009808
    %v488 = vunpack.c.0.s8 %v487
    %v489 = vlaneseq
    %v490 = vshrl.u32 %v489, 7
    %v491 = vsub.s32 %v488, %v490
    %v492 = vrot.slane %v478, %v491
    %v493 = vcombine.low %v470, %v485
    %v494 = vcombine.high %v470, %v485
    %v496 = vunpack.c.l.s4 1934713408
    %v497 = vunpack.c.0.s8 %v496
    %v498 = vlaneseq
    %v499 = vshrl.u32 %v498, 7
    %v500 = vsub.s32 %v497, %v499
    %v501 = vrot.slane %v493, %v500
    %v503 = vunpack.c.l.s4 1934713408
    %v504 = vunpack.c.0.s8 %v503
    %v505 = vlaneseq
    %v506 = vshrl.u32 %v505, 7
    %v507 = vsub.s32 %v504, %v506
    %v508 = vrot.slane %v494, %v507
    %v509 = vcombine.low %v477, %v492
    %v510 = vcombine.high %v477, %v492
    %v512 = vunpack.c.l.s4 1934713408
    %v513 = vunpack.c.0.s8 %v512
    %v514 = vlaneseq
    %v515 = vshrl.u32 %v514, 7
    %v516 = vsub.s32 %v513, %v515
    %v517 = vrot.slane %v509, %v516
    %v519 = vunpack.c.l.s4 1934713408
    %v520 = vunpack.c.0.s8 %v519
    %v521 = vlaneseq
    %v522 = vshrl.u32 %v521, 7
    %v523 = vsub.s32 %v520, %v522
    %v524 = vrot.slane %v510, %v523
    %v525 = vcombine.high %v501, 0.0
    %v526 = vcombine.high %v508, 0.0
    %v527 = vcombine.high %v517, 0.0
    %v528 = vcombine.high %v524, 0.0
    %v529 = vcombine.high %v250, 0.0
    %v531 = vunpack.c.l.s4 1983009808
    %v532 = vunpack.c.0.s8 %v531
    %v533 = vlaneseq
    %v534 = vshrl.u32 %v533, 7
    %v535 = vsub.s32 %v532, %v534
    %v536 = vrot.slane %v250, %v535
    %v538 = vunpack.c.l.s4 1983009808
    %v539 = vunpack.c.0.s8 %v538
    %v540 = vlaneseq
    %v541 = vshrl.u32 %v540, 7
    %v542 = vsub.s32 %v539, %v541
    %v543 = vrot.slane %v529, %v542
    %v544 = vcombine.high %v252, 0.0
    %v546 = vunpack.c.l.s4 1983009808
    %v547 = vunpack.c.0.s8 %v546
    %v548 = vlaneseq
    %v549 = vshrl.u32 %v548, 7
    %v550 = vsub.s32 %v547, %v549
    %v551 = vrot.slane %v252, %v550
    %v553 = vunpack.c.l.s4 1983009808
    %v554 = vunpack.c.0.s8 %v553
    %v555 = vlaneseq
    %v556 = vshrl.u32 %v555, 7
    %v557 = vsub.s32 %v554, %v556
    %v558 = vrot.slane %v544, %v557
    %v559 = vcombine.low %v536, %v551
    %v560 = vcombine.high %v536, %v551
    %v562 = vunpack.c.l.s4 1934713408
    %v563 = vunpack.c.0.s8 %v562
    %v564 = vlaneseq
    %v565 = vshrl.u32 %v564, 7
    %v566 = vsub.s32 %v563, %v565
    %v567 = vrot.slane %v559, %v566
    %v569 = vunpack.c.l.s4 1934713408
    %v570 = vunpack.c.0.s8 %v569
    %v571 = vlaneseq
    %v572 = vshrl.u32 %v571, 7
    %v573 = vsub.s32 %v570, %v572
    %v574 = vrot.slane %v560, %v573
    %v575 = vcombine.low %v543, %v558
    %v576 = vcombine.high %v543, %v558
    %v578 = vunpack.c.l.s4 1934713408
    %v579 = vunpack.c.0.s8 %v578
    %v580 = vlaneseq
    %v581 = vshrl.u32 %v580, 7
    %v582 = vsub.s32 %v579, %v581
    %v583 = vrot.slane %v575, %v582
    %v585 = vunpack.c.l.s4 1934713408
    %v586 = vunpack.c.0.s8 %v585
    %v587 = vlaneseq
    %v588 = vshrl.u32 %v587, 7
    %v589 = vsub.s32 %v586, %v588
    %v590 = vrot.slane %v576, %v589
    %v591 = vcombine.high %v567, 0.0
    %v592 = vcombine.high %v574, 0.0
    %v593 = vcombine.high %v583, 0.0
    %v594 = vcombine.high %v590, 0.0
    %v595 = vcombine.high %v254, 0.0
    %v597 = vunpack.c.l.s4 1983009808
    %v598 = vunpack.c.0.s8 %v597
    %v599 = vlaneseq
    %v600 = vshrl.u32 %v599, 7
    %v601 = vsub.s32 %v598, %v600
    %v602 = vrot.slane %v254, %v601
    %v604 = vunpack.c.l.s4 1983009808
    %v605 = vunpack.c.0.s8 %v604
    %v606 = vlaneseq
    %v607 = vshrl.u32 %v606, 7
    %v608 = vsub.s32 %v605, %v607
    %v609 = vrot.slane %v595, %v608
    %v610 = vcombine.high %v256, 0.0
    %v612 = vunpack.c.l.s4 1983009808
    %v613 = vunpack.c.0.s8 %v612
    %v614 = vlaneseq
    %v615 = vshrl.u32 %v614, 7
    %v616 = vsub.s32 %v613, %v615
    %v617 = vrot.slane %v256, %v616
    %v619 = vunpack.c.l.s4 1983009808
    %v620 = vunpack.c.0.s8 %v619
    %v621 = vlaneseq
    %v622 = vshrl.u32 %v621, 7
    %v623 = vsub.s32 %v620, %v622
    %v624 = vrot.slane %v610, %v623
    %v625 = vcombine.low %v602, %v617
    %v626 = vcombine.high %v602, %v617
    %v628 = vunpack.c.l.s4 1934713408
    %v629 = vunpack.c.0.s8 %v628
    %v630 = vlaneseq
    %v631 = vshrl.u32 %v630, 7
    %v632 = vsub.s32 %v629, %v631
    %v633 = vrot.slane %v625, %v632
    %v635 = vunpack.c.l.s4 1934713408
    %v636 = vunpack.c.0.s8 %v635
    %v637 = vlaneseq
    %v638 = vshrl.u32 %v637, 7
    %v639 = vsub.s32 %v636, %v638
    %v640 = vrot.slane %v626, %v639
    %v641 = vcombine.low %v609, %v624
    %v642 = vcombine.high %v609, %v624
    %v644 = vunpack.c.l.s4 1934713408
    %v645 = vunpack.c.0.s8 %v644
    %v646 = vlaneseq
    %v647 = vshrl.u32 %v646, 7
    %v648 = vsub.s32 %v645, %v647
    %v649 = vrot.slane %v641, %v648
    %v651 = vunpack.c.l.s4 1934713408
    %v652 = vunpack.c.0.s8 %v651
    %v653 = vlaneseq
    %v654 = vshrl.u32 %v653, 7
    %v655 = vsub.s32 %v652, %v654
    %v656 = vrot.slane %v642, %v655
    %v657 = vcombine.high %v633, 0.0
    %v658 = vcombine.high %v640, 0.0
    %v659 = vcombine.high %v649, 0.0
    %v660 = vcombine.high %v656, 0.0
    %v661 = vcombine.high %v258, 0.0
    %v663 = vunpack.c.l.s4 1983009808
    %v664 = vunpack.c.0.s8 %v663
    %v665 = vlaneseq
    %v666 = vshrl.u32 %v665, 7
    %v667 = vsub.s32 %v664, %v666
    %v668 = vrot.slane %v258, %v667
    %v670 = vunpack.c.l.s4 1983009808
    %v671 = vunpack.c.0.s8 %v670
    %v672 = vlaneseq
    %v673 = vshrl.u32 %v672, 7
    %v674 = vsub.s32 %v671, %v673
    %v675 = vrot.slane %v661, %v674
    %v676 = vcombine.high %v260, 0.0
    %v678 = vunpack.c.l.s4 1983009808
    %v679 = vunpack.c.0.s8 %v678
    %v680 = vlaneseq
    %v681 = vshrl.u32 %v680, 7
    %v682 = vsub.s32 %v679, %v681
    %v683 = vrot.slane %v260, %v682
    %v685 = vunpack.c.l.s4 1983009808
    %v686 = vunpack.c.0.s8 %v685
    %v687 = vlaneseq
    %v688 = vshrl.u32 %v687, 7
    %v689 = vsub.s32 %v686, %v688
    %v690 = vrot.slane %v676, %v689
    %v691 = vcombine.low %v668, %v683
    %v692 = vcombine.high %v668, %v683
    %v694 = vunpack.c.l.s4 1934713408
    %v695 = vunpack.c.0.s8 %v694
    %v696 = vlaneseq
    %v697 = vshrl.u32 %v696, 7
    %v698 = vsub.s32 %v695, %v697
    %v699 = vrot.slane %v691, %v698
    %v701 = vunpack.c.l.s4 1934713408
    %v702 = vunpack.c.0.s8 %v701
    %v703 = vlaneseq
    %v704 = vshrl.u32 %v703, 7
    %v705 = vsub.s32 %v702, %v704
    %v706 = vrot.slane %v692, %v705
    %v707 = vcombine.low %v675, %v690
    %v708 = vcombine.high %v675, %v690
    %v710 = vunpack.c.l.s4 1934713408
    %v711 = vunpack.c.0.s8 %v710
    %v712 = vlaneseq
    %v713 = vshrl.u32 %v712, 7
    %v714 = vsub.s32 %v711, %v713
    %v715 = vrot.slane %v707, %v714
    %v717 = vunpack.c.l.s4 1934713408
    %v718 = vunpack.c.0.s8 %v717
    %v719 = vlaneseq
    %v720 = vshrl.u32 %v719, 7
    %v721 = vsub.s32 %v718, %v720
    %v722 = vrot.slane %v708, %v721
    %v723 = vcombine.high %v699, 0.0
    %v724 = vcombine.high %v706, 0.0
    %v725 = vcombine.high %v715, 0.0
    %v726 = vcombine.high %v722, 0.0
    %v727 = vcombine.high %v262, 0.0
    %v729 = vunpack.c.l.s4 1983009808
    %v730 = vunpack.c.0.s8 %v729
    %v731 = vlaneseq
    %v732 = vshrl.u32 %v731, 7
    %v733 = vsub.s32 %v730, %v732
    %v734 = vrot.slane %v262, %v733
    %v736 = vunpack.c.l.s4 1983009808
    %v737 = vunpack.c.0.s8 %v736
    %v738 = vlaneseq
    %v739 = vshrl.u32 %v738, 7
    %v740 = vsub.s32 %v737, %v739
    %v741 = vrot.slane %v727, %v740
    %v742 = vcombine.high %v264, 0.0
    %v744 = vunpack.c.l.s4 1983009808
    %v745 = vunpack.c.0.s8 %v744
    %v746 = vlaneseq
    %v747 = vshrl.u32 %v746, 7
    %v748 = vsub.s32 %v745, %v747
    %v749 = vrot.slane %v264, %v748
    %v751 = vunpack.c.l.s4 1983009808
    %v752 = vunpack.c.0.s8 %v751
    %v753 = vlaneseq
    %v754 = vshrl.u32 %v753, 7
    %v755 = vsub.s32 %v752, %v754
    %v756 = vrot.slane %v742, %v755
    %v757 = vcombine.low %v734, %v749
    %v758 = vcombine.high %v734, %v749
    %v760 = vunpack.c.l.s4 1934713408
    %v761 = vunpack.c.0.s8 %v760
    %v762 = vlaneseq
    %v763 = vshrl.u32 %v762, 7
    %v764 = vsub.s32 %v761, %v763
    %v765 = vrot.slane %v757, %v764
    %v767 = vunpack.c.l.s4 1934713408
    %v768 = vunpack.c.0.s8 %v767
    %v769 = vlaneseq
    %v770 = vshrl.u32 %v769, 7
    %v771 = vsub.s32 %v768, %v770
    %v772 = vrot.slane %v758, %v771
    %v773 = vcombine.low %v741, %v756
    %v774 = vcombine.high %v741, %v756
    %v776 = vunpack.c.l.s4 1934713408
    %v777 = vunpack.c.0.s8 %v776
    %v778 = vlaneseq
    %v779 = vshrl.u32 %v778, 7
    %v780 = vsub.s32 %v777, %v779
    %v781 = vrot.slane %v773, %v780
    %v783 = vunpack.c.l.s4 1934713408
    %v784 = vunpack.c.0.s8 %v783
    %v785 = vlaneseq
    %v786 = vshrl.u32 %v785, 7
    %v787 = vsub.s32 %v784, %v786
    %v788 = vrot.slane %v774, %v787
    %v789 = vcombine.high %v765, 0.0
    %v790 = vcombine.high %v772, 0.0
    %v791 = vcombine.high %v781, 0.0
    %v792 = vcombine.high %v788, 0.0
    %vm793 = vcmask 1041408
    %v794 = vsel %vm793, %v303, 0.0
    %v795 = vsel %vm793, %v567, 0.0
    %v796 = vadd.f32 %v794, %v795
    %797 = vadd.xlane.f32.xlu0 %v796
    %v798 = vpop.xlane.xlu0 %797
    %v799 = vsel %vm793, %v327, 0.0
    %v800 = vsel %vm793, %v591, 0.0
    %v801 = vadd.f32 %v799, %v800
    %802 = vadd.xlane.f32.xlu0 %v801
    %v803 = vpop.xlane.xlu0 %802
    %v804 = vsel %vm793, %v310, 0.0
    %v805 = vsel %vm793, %v574, 0.0
    %v806 = vadd.f32 %v804, %v805
    %807 = vadd.xlane.f32.xlu0 %v806
    %v808 = vpop.xlane.xlu0 %807
    %v809 = vsel %vm793, %v328, 0.0
    %v810 = vsel %vm793, %v592, 0.0
    %v811 = vadd.f32 %v809, %v810
    %812 = vadd.xlane.f32.xlu0 %v811
    %v813 = vpop.xlane.xlu0 %812
    %v814 = vsel %vm793, %v319, 0.0
    %v815 = vsel %vm793, %v583, 0.0
    %v816 = vadd.f32 %v814, %v815
    %817 = vadd.xlane.f32.xlu0 %v816
    %v818 = vpop.xlane.xlu0 %817
    %v819 = vsel %vm793, %v329, 0.0
    %v820 = vsel %vm793, %v593, 0.0
    %v821 = vadd.f32 %v819, %v820
    %822 = vadd.xlane.f32.xlu0 %v821
    %v823 = vpop.xlane.xlu0 %822
    %v824 = vsel %vm793, %v326, 0.0
    %v825 = vsel %vm793, %v590, 0.0
    %v826 = vadd.f32 %v824, %v825
    %827 = vadd.xlane.f32.xlu0 %v826
    %v828 = vpop.xlane.xlu0 %827
    %v829 = vsel %vm793, %v330, 0.0
    %v830 = vsel %vm793, %v594, 0.0
    %v831 = vadd.f32 %v829, %v830
    %832 = vadd.xlane.f32.xlu0 %v831
    %v833 = vpop.xlane.xlu0 %832
    %v834 = vsel %vm793, %v369, 0.0
    %v835 = vsel %vm793, %v633, 0.0
    %v836 = vadd.f32 %v834, %v835
    %837 = vadd.xlane.f32.xlu0 %v836
    %v838 = vpop.xlane.xlu0 %837
    %v839 = vsel %vm793, %v393, 0.0
    %v840 = vsel %vm793, %v657, 0.0
    %v841 = vadd.f32 %v839, %v840
    %842 = vadd.xlane.f32.xlu0 %v841
    %v843 = vpop.xlane.xlu0 %842
    %v844 = vsel %vm793, %v376, 0.0
    %v845 = vsel %vm793, %v640, 0.0
    %v846 = vadd.f32 %v844, %v845
    %847 = vadd.xlane.f32.xlu0 %v846
    %v848 = vpop.xlane.xlu0 %847
    %v849 = vsel %vm793, %v394, 0.0
    %v850 = vsel %vm793, %v658, 0.0
    %v851 = vadd.f32 %v849, %v850
    %852 = vadd.xlane.f32.xlu0 %v851
    %v853 = vpop.xlane.xlu0 %852
    %v854 = vsel %vm793, %v385, 0.0
    %v855 = vsel %vm793, %v649, 0.0
    %v856 = vadd.f32 %v854, %v855
    %857 = vadd.xlane.f32.xlu0 %v856
    %v858 = vpop.xlane.xlu0 %857
    %v859 = vsel %vm793, %v395, 0.0
    %v860 = vsel %vm793, %v659, 0.0
    %v861 = vadd.f32 %v859, %v860
    %862 = vadd.xlane.f32.xlu0 %v861
    %v863 = vpop.xlane.xlu0 %862
    %v864 = vsel %vm793, %v392, 0.0
    %v865 = vsel %vm793, %v656, 0.0
    %v866 = vadd.f32 %v864, %v865
    %867 = vadd.xlane.f32.xlu0 %v866
    %v868 = vpop.xlane.xlu0 %867
    %v869 = vsel %vm793, %v396, 0.0
    %v870 = vsel %vm793, %v660, 0.0
    %v871 = vadd.f32 %v869, %v870
    %872 = vadd.xlane.f32.xlu0 %v871
    %v873 = vpop.xlane.xlu0 %872
    %v874 = vsel %vm793, %v435, 0.0
    %v875 = vsel %vm793, %v699, 0.0
    %v876 = vadd.f32 %v874, %v875
    %877 = vadd.xlane.f32.xlu0 %v876
    %v878 = vpop.xlane.xlu0 %877
    %v879 = vsel %vm793, %v459, 0.0
    %v880 = vsel %vm793, %v723, 0.0
    %v881 = vadd.f32 %v879, %v880
    %882 = vadd.xlane.f32.xlu0 %v881
    %v883 = vpop.xlane.xlu0 %882
    %v884 = vsel %vm793, %v442, 0.0
    %v885 = vsel %vm793, %v706, 0.0
    %v886 = vadd.f32 %v884, %v885
    %887 = vadd.xlane.f32.xlu0 %v886
    %v888 = vpop.xlane.xlu0 %887
    %v889 = vsel %vm793, %v460, 0.0
    %v890 = vsel %vm793, %v724, 0.0
    %v891 = vadd.f32 %v889, %v890
    %892 = vadd.xlane.f32.xlu0 %v891
    %v893 = vpop.xlane.xlu0 %892
    %v894 = vsel %vm793, %v451, 0.0
    %v895 = vsel %vm793, %v715, 0.0
    %v896 = vadd.f32 %v894, %v895
    %897 = vadd.xlane.f32.xlu0 %v896
    %v898 = vpop.xlane.xlu0 %897
    %v899 = vsel %vm793, %v461, 0.0
    %v900 = vsel %vm793, %v725, 0.0
    %v901 = vadd.f32 %v899, %v900
    %902 = vadd.xlane.f32.xlu0 %v901
    %v903 = vpop.xlane.xlu0 %902
    %v904 = vsel %vm793, %v458, 0.0
    %v905 = vsel %vm793, %v722, 0.0
    %v906 = vadd.f32 %v904, %v905
    %907 = vadd.xlane.f32.xlu0 %v906
    %v908 = vpop.xlane.xlu0 %907
    %v909 = vsel %vm793, %v462, 0.0
    %v910 = vsel %vm793, %v726, 0.0
    %v911 = vadd.f32 %v909, %v910
    %912 = vadd.xlane.f32.xlu0 %v911
    %v913 = vpop.xlane.xlu0 %912
    %v914 = vsel %vm793, %v501, 0.0
    %v915 = vsel %vm793, %v765, 0.0
    %v916 = vadd.f32 %v914, %v915
    %917 = vadd.xlane.f32.xlu0 %v916
    %v918 = vpop.xlane.xlu0 %917
    %v919 = vsel %vm793, %v525, 0.0
    %v920 = vsel %vm793, %v789, 0.0
    %v921 = vadd.f32 %v919, %v920
    %922 = vadd.xlane.f32.xlu0 %v921
    %v923 = vpop.xlane.xlu0 %922
    %v924 = vsel %vm793, %v508, 0.0
    %v925 = vsel %vm793, %v772, 0.0
    %v926 = vadd.f32 %v924, %v925
    %927 = vadd.xlane.f32.xlu0 %v926
    %v928 = vpop.xlane.xlu0 %927
    %v929 = vsel %vm793, %v526, 0.0
    %v930 = vsel %vm793, %v790, 0.0
    %v931 = vadd.f32 %v929, %v930
    %932 = vadd.xlane.f32.xlu0 %v931
    %v933 = vpop.xlane.xlu0 %932
    %v934 = vsel %vm793, %v517, 0.0
    %v935 = vsel %vm793, %v781, 0.0
    %v936 = vadd.f32 %v934, %v935
    %937 = vadd.xlane.f32.xlu0 %v936
    %v938 = vpop.xlane.xlu0 %937
    %v939 = vsel %vm793, %v527, 0.0
    %v940 = vsel %vm793, %v791, 0.0
    %v941 = vadd.f32 %v939, %v940
    %942 = vadd.xlane.f32.xlu0 %v941
    %v943 = vpop.xlane.xlu0 %942
    %v944 = vsel %vm793, %v524, 0.0
    %v945 = vsel %vm793, %v788, 0.0
    %v946 = vadd.f32 %v944, %v945
    %947 = vadd.xlane.f32.xlu0 %v946
    %v948 = vpop.xlane.xlu0 %947
    %v949 = vsel %vm793, %v528, 0.0
    %v950 = vsel %vm793, %v792, 0.0
    %v951 = vadd.f32 %v949, %v950
    %952 = vadd.xlane.f32.xlu0 %v951
    %v953 = vpop.xlane.xlu0 %952
    %v954 = vrcp.pop 256.0
    %v955 = vmul.f32 %v798, %v954
    %v956 = vmul.f32 %v803, %v954
    %v957 = vmul.f32 %v808, %v954
    %v958 = vmul.f32 %v813, %v954
    %v959 = vmul.f32 %v818, %v954
    %v960 = vmul.f32 %v823, %v954
    %v961 = vmul.f32 %v828, %v954
    %v962 = vmul.f32 %v833, %v954
    %v963 = vmul.f32 %v838, %v954
    %v964 = vmul.f32 %v843, %v954
    %v965 = vmul.f32 %v848, %v954
    %v966 = vmul.f32 %v853, %v954
    %v967 = vmul.f32 %v858, %v954
    %v968 = vmul.f32 %v863, %v954
    %v969 = vmul.f32 %v868, %v954
    %v970 = vmul.f32 %v873, %v954
    %v971 = vmul.f32 %v878, %v954
    %v972 = vmul.f32 %v883, %v954
    %v973 = vmul.f32 %v888, %v954
    %v974 = vmul.f32 %v893, %v954
    %v975 = vmul.f32 %v898, %v954
    %v976 = vmul.f32 %v903, %v954
    %v977 = vmul.f32 %v908, %v954
    %v978 = vmul.f32 %v913, %v954
    %v979 = vmul.f32 %v918, %v954
    %v980 = vmul.f32 %v923, %v954
    %v981 = vmul.f32 %v928, %v954
    %v982 = vmul.f32 %v933, %v954
    %v983 = vmul.f32 %v938, %v954
    %v984 = vmul.f32 %v943, %v954
    %v985 = vmul.f32 %v948, %v954
    %v986 = vmul.f32 %v953, %v954
    %v1019 = vlaneseq
    %v1020 = vand.u32 %v1019, 127
    %v1021 = vlaneseq
    %v1022 = vshrl.u32 %v1021, 7
    %v1023 = vsub.s32 %v1020, %v1022
    %v1024 = vrot.slane %v955, %v1023
    %v1025 = vlaneseq
    %v1026 = vshrl.u32 %v1025, 7
    %v1027 = vsub.s32 %v1020, %v1026
    %v1028 = vrot.slane %v956, %v1027
    %v1029 = vlaneseq
    %v1030 = vshrl.u32 %v1029, 7
    %v1031 = vsub.s32 %v1020, %v1030
    %v1032 = vrot.slane %v957, %v1031
    %v1033 = vlaneseq
    %v1034 = vshrl.u32 %v1033, 7
    %v1035 = vsub.s32 %v1020, %v1034
    %v1036 = vrot.slane %v958, %v1035
    %v1037 = vlaneseq
    %v1038 = vshrl.u32 %v1037, 7
    %v1039 = vsub.s32 %v1020, %v1038
    %v1040 = vrot.slane %v959, %v1039
    %v1041 = vlaneseq
    %v1042 = vshrl.u32 %v1041, 7
    %v1043 = vsub.s32 %v1020, %v1042
    %v1044 = vrot.slane %v960, %v1043
    %v1045 = vlaneseq
    %v1046 = vshrl.u32 %v1045, 7
    %v1047 = vsub.s32 %v1020, %v1046
    %v1048 = vrot.slane %v961, %v1047
    %v1049 = vlaneseq
    %v1050 = vshrl.u32 %v1049, 7
    %v1051 = vsub.s32 %v1020, %v1050
    %v1052 = vrot.slane %v962, %v1051
    %v1053 = vlaneseq
    %v1054 = vshrl.u32 %v1053, 7
    %v1055 = vsub.s32 %v1020, %v1054
    %v1056 = vrot.slane %v963, %v1055
    %v1057 = vlaneseq
    %v1058 = vshrl.u32 %v1057, 7
    %v1059 = vsub.s32 %v1020, %v1058
    %v1060 = vrot.slane %v964, %v1059
    %v1061 = vlaneseq
    %v1062 = vshrl.u32 %v1061, 7
    %v1063 = vsub.s32 %v1020, %v1062
    %v1064 = vrot.slane %v965, %v1063
    %v1065 = vlaneseq
    %v1066 = vshrl.u32 %v1065, 7
    %v1067 = vsub.s32 %v1020, %v1066
    %v1068 = vrot.slane %v966, %v1067
    %v1069 = vlaneseq
    %v1070 = vshrl.u32 %v1069, 7
    %v1071 = vsub.s32 %v1020, %v1070
    %v1072 = vrot.slane %v967, %v1071
    %v1073 = vlaneseq
    %v1074 = vshrl.u32 %v1073, 7
    %v1075 = vsub.s32 %v1020, %v1074
    %v1076 = vrot.slane %v968, %v1075
    %v1077 = vlaneseq
    %v1078 = vshrl.u32 %v1077, 7
    %v1079 = vsub.s32 %v1020, %v1078
    %v1080 = vrot.slane %v969, %v1079
    %v1081 = vlaneseq
    %v1082 = vshrl.u32 %v1081, 7
    %v1083 = vsub.s32 %v1020, %v1082
    %v1084 = vrot.slane %v970, %v1083
    %v1085 = vlaneseq
    %v1086 = vshrl.u32 %v1085, 7
    %v1087 = vsub.s32 %v1020, %v1086
    %v1088 = vrot.slane %v971, %v1087
    %v1089 = vlaneseq
    %v1090 = vshrl.u32 %v1089, 7
    %v1091 = vsub.s32 %v1020, %v1090
    %v1092 = vrot.slane %v972, %v1091
    %v1093 = vlaneseq
    %v1094 = vshrl.u32 %v1093, 7
    %v1095 = vsub.s32 %v1020, %v1094
    %v1096 = vrot.slane %v973, %v1095
    %v1097 = vlaneseq
    %v1098 = vshrl.u32 %v1097, 7
    %v1099 = vsub.s32 %v1020, %v1098
    %v1100 = vrot.slane %v974, %v1099
    %v1101 = vlaneseq
    %v1102 = vshrl.u32 %v1101, 7
    %v1103 = vsub.s32 %v1020, %v1102
    %v1104 = vrot.slane %v975, %v1103
    %v1105 = vlaneseq
    %v1106 = vshrl.u32 %v1105, 7
    %v1107 = vsub.s32 %v1020, %v1106
    %v1108 = vrot.slane %v976, %v1107
    %v1109 = vlaneseq
    %v1110 = vshrl.u32 %v1109, 7
    %v1111 = vsub.s32 %v1020, %v1110
    %v1112 = vrot.slane %v977, %v1111
    %v1113 = vlaneseq
    %v1114 = vshrl.u32 %v1113, 7
    %v1115 = vsub.s32 %v1020, %v1114
    %v1116 = vrot.slane %v978, %v1115
    %v1117 = vlaneseq
    %v1118 = vshrl.u32 %v1117, 7
    %v1119 = vsub.s32 %v1020, %v1118
    %v1120 = vrot.slane %v979, %v1119
    %v1121 = vlaneseq
    %v1122 = vshrl.u32 %v1121, 7
    %v1123 = vsub.s32 %v1020, %v1122
    %v1124 = vrot.slane %v980, %v1123
    %v1125 = vlaneseq
    %v1126 = vshrl.u32 %v1125, 7
    %v1127 = vsub.s32 %v1020, %v1126
    %v1128 = vrot.slane %v981, %v1127
    %v1129 = vlaneseq
    %v1130 = vshrl.u32 %v1129, 7
    %v1131 = vsub.s32 %v1020, %v1130
    %v1132 = vrot.slane %v982, %v1131
    %v1133 = vlaneseq
    %v1134 = vshrl.u32 %v1133, 7
    %v1135 = vsub.s32 %v1020, %v1134
    %v1136 = vrot.slane %v983, %v1135
    %v1137 = vlaneseq
    %v1138 = vshrl.u32 %v1137, 7
    %v1139 = vsub.s32 %v1020, %v1138
    %v1140 = vrot.slane %v984, %v1139
    %v1141 = vlaneseq
    %v1142 = vshrl.u32 %v1141, 7
    %v1143 = vsub.s32 %v1020, %v1142
    %v1144 = vrot.slane %v985, %v1143
    %v1145 = vlaneseq
    %v1146 = vshrl.u32 %v1145, 7
    %v1147 = vsub.s32 %v1020, %v1146
    %v1148 = vrot.slane %v986, %v1147
    %vm1149 = vcmask 1041409
    %v1150 = vsel %vm1149, %v1028, %v1024
    %vm1151 = vcmask 1042434
    %v1152 = vsel %vm1151, %v1032, %v1150
    %vm1153 = vcmask 1043459
    %v1154 = vsel %vm1153, %v1036, %v1152
    %vm1155 = vcmask 1044484
    %v1156 = vsel %vm1155, %v1040, %v1154
    %vm1157 = vcmask 1045509
    %v1158 = vsel %vm1157, %v1044, %v1156
    %vm1159 = vcmask 1046534
    %v1160 = vsel %vm1159, %v1048, %v1158
    %vm1161 = vcmask 1047559
    %v1162 = vsel %vm1161, %v1052, %v1160
    %v1163 = vsel %vm1149, %v1060, %v1056
    %v1164 = vsel %vm1151, %v1064, %v1163
    %v1165 = vsel %vm1153, %v1068, %v1164
    %v1166 = vsel %vm1155, %v1072, %v1165
    %v1167 = vsel %vm1157, %v1076, %v1166
    %v1168 = vsel %vm1159, %v1080, %v1167
    %v1169 = vsel %vm1161, %v1084, %v1168
    %v1170 = vsel %vm1149, %v1092, %v1088
    %v1171 = vsel %vm1151, %v1096, %v1170
    %v1172 = vsel %vm1153, %v1100, %v1171
    %v1173 = vsel %vm1155, %v1104, %v1172
    %v1174 = vsel %vm1157, %v1108, %v1173
    %v1175 = vsel %vm1159, %v1112, %v1174
    %v1176 = vsel %vm1161, %v1116, %v1175
    %v1177 = vsel %vm1149, %v1124, %v1120
    %v1178 = vsel %vm1151, %v1128, %v1177
    %v1179 = vsel %vm1153, %v1132, %v1178
    %v1180 = vsel %vm1155, %v1136, %v1179
    %v1181 = vsel %vm1157, %v1140, %v1180
    %v1182 = vsel %vm1159, %v1144, %v1181
    %v1183 = vsel %vm1161, %v1148, %v1182
    %1188 = vxpose.xlu0.b32.start [1/16] %v1162, 128
    %1189 = vxpose.xlu0.b32.cont [2/16] %v1169, 128
    %1190 = vxpose.xlu0.b32.cont [3/16] %v1176, 128
    %1191 = vxpose.xlu0.b32.cont [4/16] %v1183, 128
    %1192 = vxpose.xlu0.b32.cont [5/16] 0.0, 128
    %1193 = vxpose.xlu0.b32.cont [6/16] 0.0, 128
    %1194 = vxpose.xlu0.b32.cont [7/16] 0.0, 128
    %1195 = vxpose.xlu0.b32.cont [8/16] 0.0, 128
    %1196 = vxpose.xlu0.b32.cont [9/16] 0.0, 128
    %1197 = vxpose.xlu0.b32.cont [10/16] 0.0, 128
    %1198 = vxpose.xlu0.b32.cont [11/16] 0.0, 128
    %1199 = vxpose.xlu0.b32.cont [12/16] 0.0, 128
    %1200 = vxpose.xlu0.b32.cont [13/16] 0.0, 128
    %1201 = vxpose.xlu0.b32.cont [14/16] 0.0, 128
    %1202 = vxpose.xlu0.b32.cont [15/16] 0.0, 128
    %1203 = vxpose.xlu0.b32.end [16/16] 0.0, 128
    %v1204 = vpop.trf.xlu0
    %v1205 = vpop.trf.xlu0
    %v1206 = vpop.trf.xlu0
    %v1207 = vpop.trf.xlu0
    %v1208 = vpop.trf.xlu0
    %v1209 = vpop.trf.xlu0
    %v1210 = vpop.trf.xlu0
    %v1211 = vpop.trf.xlu0
    %v1212 = vpop.trf.xlu0
    %v1213 = vpop.trf.xlu0
    %v1214 = vpop.trf.xlu0
    %v1215 = vpop.trf.xlu0
    %v1216 = vpop.trf.xlu0
    %v1217 = vpop.trf.xlu0
    %v1218 = vpop.trf.xlu0
    %v1219 = vpop.trf.xlu0
    %v1220 = vld [vmem:[%s4] sm:$0x3]
    %v1221 = vld [vmem:[%s4 + $0x2] sm:$0x1]
    %v1222 = vld [vmem:[%s2] sm:$0xff]
    %v1223 = vld [vmem:[%s2 + $0x8] sm:$0xff]
    %v1224 = vld [vmem:[%s2 + $0x10] sm:$0xff]
    %v1225 = vld [vmem:[%s2 + $0x18] sm:$0xff]
    %v1226 = vld [vmem:[%s2 + $0x20] sm:$0xff]
    %v1227 = vld [vmem:[%s2 + $0x28] sm:$0xff]
    %v1228 = vld [vmem:[%s2 + $0x30] sm:$0xff]
    %v1229 = vld [vmem:[%s2 + $0x38] sm:$0xff]
    %v1231 = vlaneseq
    %v1232 = vshrl.u32 %v1231, 7
    %v1233 = vsub.s32 0, %v1232
    %v1234 = vrot.slane %v1220, %v1233
    %v1235 = vlaneseq
    %v1236 = vshrl.u32 %v1235, 7
    %v1237 = vsub.s32 1, %v1236
    %v1238 = vrot.slane %v1220, %v1237
    %vm1241 = vcmask 261120
    %v1243 = vsel %vm1241, %v1204, 0
    %1245 = vmatprep.subr.mxu0 0.0
    %1246 = vmatpush1.msra.mxu0 0.0
    %1247 = vmatprep.subr.mxu0 0.0
    %1248 = vmatpush1.msra.mxu0 0.0
    %1249 = vmatprep.subr.mxu0 0.0
    %1250 = vmatpush1.msra.mxu0 0.0
    %1251 = vmatprep.subr.mxu0 0.0
    %1252 = vmatpush1.msra.mxu0 0.0
    %1253 = vmatprep.subr.mxu0 0.0
    %1254 = vmatpush1.msra.mxu0 0.0
    %1255 = vmatprep.subr.mxu0 0.0
    %1256 = vmatpush1.msra.mxu0 0.0
    %1257 = vmatprep.subr.mxu0 0.0
    %1258 = vmatpush1.msra.mxu0 0.0
    %1259 = vmatprep.subr.mxu0 0.0
    %1260 = vmatpush1.msra.mxu0 0.0
    %1261 = vmatprep.subr.mxu0 0.0
    %1262 = vmatpush1.msra.mxu0 0.0
    %1263 = vmatprep.subr.mxu0 0.0
    %1264 = vmatpush1.msra.mxu0 0.0
    %1265 = vmatprep.subr.mxu0 0.0
    %1266 = vmatpush1.msra.mxu0 0.0
    %1267 = vmatprep.subr.mxu0 0.0
    %1268 = vmatpush1.msra.mxu0 0.0
    %1269 = vmatprep.subr.mxu0 %v1229
    %1270 = vmatpush1.msra.mxu0 %v1228
    %1271 = vmatprep.subr.mxu0 %v1227
    %1272 = vmatpush1.msra.mxu0 %v1226
    %1273 = vmatprep.subr.mxu0 %v1225
    %1274 = vmatpush1.msra.mxu0 %v1224
    %1275 = vmatprep.subr.mxu0 %v1223
    %1276 = vmatpush1.msra.mxu0 %v1222
    %1277 = vmatprep.subr.mxu0 0.0
    %1278 = vmatpush2.msra.mxu0 0.0
    %1279 = vmatprep.subr.mxu0 0.0
    %1280 = vmatpush2.msra.mxu0 0.0
    %1281 = vmatprep.subr.mxu0 0.0
    %1282 = vmatpush2.msra.mxu0 0.0
    %1283 = vmatprep.subr.mxu0 0.0
    %1284 = vmatpush2.msra.mxu0 0.0
    %1285 = vmatprep.subr.mxu0 0.0
    %1286 = vmatpush2.msra.mxu0 0.0
    %1287 = vmatprep.subr.mxu0 0.0
    %1288 = vmatpush2.msra.mxu0 0.0
    %1289 = vmatprep.subr.mxu0 0.0
    %1290 = vmatpush2.msra.mxu0 0.0
    %1291 = vmatprep.subr.mxu0 0.0
    %1292 = vmatpush2.msra.mxu0 0.0
    %1293 = vmatprep.subr.mxu0 0.0
    %1294 = vmatpush2.msra.mxu0 0.0
    %1295 = vmatprep.subr.mxu0 0.0
    %1296 = vmatpush2.msra.mxu0 0.0
    %1297 = vmatprep.subr.mxu0 0.0
    %1298 = vmatpush2.msra.mxu0 0.0
    %1299 = vmatprep.subr.mxu0 0.0
    %1300 = vmatpush2.msra.mxu0 0.0
    %1301 = vmatprep.subr.mxu0 0.0
    %1302 = vmatpush2.msra.mxu0 0.0
    %1303 = vmatprep.subr.mxu0 0.0
    %1304 = vmatpush2.msra.mxu0 0.0
    %1305 = vmatprep.subr.mxu0 0.0
    %1306 = vmatpush2.msra.mxu0 0.0
    %1307 = vmatprep.subr.mxu0 0.0
    %1308 = vmatpush2.msra.mxu0 0.0
    %1309 = vmatprep.mubr.f32.mxu0 0.0
    %1310 = vmatmul.mubr.f32.gmra.mxu0 %v1243
    %v1311 = vpop.f32.mrf.mxu0
    %v1312 = vadd.f32 %v1234, %v1311
    %v1313 = vpop.f32.mrf.mxu0
    %v1314 = vadd.f32 %v1238, %v1313
    %1315 = vdwg.mxu0
    %v1316 = vmax.f32 %v1312, 0.0
    %v1317 = vmax.f32 %v1314, 0.0
    %v1318 = vld [vmem:[%s3] sm:$0xff]
    %v1319 = vld [vmem:[%s3 + $0x8] sm:$0xff]
    %v1320 = vld [vmem:[%s3 + $0x10] sm:$0xff]
    %v1321 = vld [vmem:[%s3 + $0x18] sm:$0xff]
    %v1322 = vld [vmem:[%s3 + $0x20] sm:$0xff]
    %v1323 = vld [vmem:[%s3 + $0x28] sm:$0xff]
    %v1324 = vld [vmem:[%s3 + $0x30] sm:$0xff]
    %v1325 = vld [vmem:[%s3 + $0x38] sm:$0xff]
    %v1326 = vld [vmem:[%s3 + $0x40] sm:$0xff]
    %v1327 = vld [vmem:[%s3 + $0x48] sm:$0xff]
    %v1328 = vld [vmem:[%s3 + $0x50] sm:$0xff]
    %v1329 = vld [vmem:[%s3 + $0x58] sm:$0xff]
    %v1330 = vld [vmem:[%s3 + $0x60] sm:$0xff]
    %v1331 = vld [vmem:[%s3 + $0x68] sm:$0xff]
    %v1332 = vld [vmem:[%s3 + $0x70] sm:$0xff]
    %v1333 = vld [vmem:[%s3 + $0x78] sm:$0xff]
    %v1334 = vld [vmem:[%s3 + $0x80] sm:$0xff]
    %v1335 = vld [vmem:[%s3 + $0x88] sm:$0xff]
    %v1336 = vld [vmem:[%s3 + $0x90] sm:$0xff]
    %v1337 = vld [vmem:[%s3 + $0x98] sm:$0xff]
    %v1338 = vld [vmem:[%s3 + $0xa0] sm:$0xff]
    %v1339 = vld [vmem:[%s3 + $0xa8] sm:$0xff]
    %v1340 = vld [vmem:[%s3 + $0xb0] sm:$0xff]
    %v1341 = vld [vmem:[%s3 + $0xb8] sm:$0xff]
    %v1342 = vld [vmem:[%s3 + $0xc0] sm:$0xff]
    %v1343 = vld [vmem:[%s3 + $0xc8] sm:$0xff]
    %v1344 = vld [vmem:[%s3 + $0xd0] sm:$0xff]
    %v1345 = vld [vmem:[%s3 + $0xd8] sm:$0xff]
    %v1346 = vld [vmem:[%s3 + $0xe0] sm:$0xff]
    %v1347 = vld [vmem:[%s3 + $0xe8] sm:$0xff]
    %v1348 = vld [vmem:[%s3 + $0xf0] sm:$0xff]
    %v1349 = vld [vmem:[%s3 + $0xf8] sm:$0xff]
    %v1351 = vlaneseq
    %v1352 = vshrl.u32 %v1351, 7
    %v1353 = vsub.s32 0, %v1352
    %v1354 = vrot.slane %v1221, %v1353
    %1356 = vmatprep.subr.mxu0 0.0
    %1357 = vmatpush1.msra.mxu0 %v1333
    %1358 = vmatprep.subr.mxu0 0.0
    %1359 = vmatpush1.msra.mxu0 %v1332
    %1360 = vmatprep.subr.mxu0 0.0
    %1361 = vmatpush1.msra.mxu0 %v1331
    %1362 = vmatprep.subr.mxu0 0.0
    %1363 = vmatpush1.msra.mxu0 %v1330
    %1364 = vmatprep.subr.mxu0 0.0
    %1365 = vmatpush1.msra.mxu0 %v1329
    %1366 = vmatprep.subr.mxu0 0.0
    %1367 = vmatpush1.msra.mxu0 %v1328
    %1368 = vmatprep.subr.mxu0 0.0
    %1369 = vmatpush1.msra.mxu0 %v1327
    %1370 = vmatprep.subr.mxu0 0.0
    %1371 = vmatpush1.msra.mxu0 %v1326
    %1372 = vmatprep.subr.mxu0 0.0
    %1373 = vmatpush1.msra.mxu0 %v1325
    %1374 = vmatprep.subr.mxu0 0.0
    %1375 = vmatpush1.msra.mxu0 %v1324
    %1376 = vmatprep.subr.mxu0 0.0
    %1377 = vmatpush1.msra.mxu0 %v1323
    %1378 = vmatprep.subr.mxu0 0.0
    %1379 = vmatpush1.msra.mxu0 %v1322
    %1380 = vmatprep.subr.mxu0 0.0
    %1381 = vmatpush1.msra.mxu0 %v1321
    %1382 = vmatprep.subr.mxu0 0.0
    %1383 = vmatpush1.msra.mxu0 %v1320
    %1384 = vmatprep.subr.mxu0 0.0
    %1385 = vmatpush1.msra.mxu0 %v1319
    %1386 = vmatprep.subr.mxu0 0.0
    %1387 = vmatpush1.msra.mxu0 %v1318
    %1388 = vmatprep.subr.mxu0 0.0
    %1389 = vmatpush2.msra.mxu0 %v1349
    %1390 = vmatprep.subr.mxu0 0.0
    %1391 = vmatpush2.msra.mxu0 %v1348
    %1392 = vmatprep.subr.mxu0 0.0
    %1393 = vmatpush2.msra.mxu0 %v1347
    %1394 = vmatprep.subr.mxu0 0.0
    %1395 = vmatpush2.msra.mxu0 %v1346
    %1396 = vmatprep.subr.mxu0 0.0
    %1397 = vmatpush2.msra.mxu0 %v1345
    %1398 = vmatprep.subr.mxu0 0.0
    %1399 = vmatpush2.msra.mxu0 %v1344
    %1400 = vmatprep.subr.mxu0 0.0
    %1401 = vmatpush2.msra.mxu0 %v1343
    %1402 = vmatprep.subr.mxu0 0.0
    %1403 = vmatpush2.msra.mxu0 %v1342
    %1404 = vmatprep.subr.mxu0 0.0
    %1405 = vmatpush2.msra.mxu0 %v1341
    %1406 = vmatprep.subr.mxu0 0.0
    %1407 = vmatpush2.msra.mxu0 %v1340
    %1408 = vmatprep.subr.mxu0 0.0
    %1409 = vmatpush2.msra.mxu0 %v1339
    %1410 = vmatprep.subr.mxu0 0.0
    %1411 = vmatpush2.msra.mxu0 %v1338
    %1412 = vmatprep.subr.mxu0 0.0
    %1413 = vmatpush2.msra.mxu0 %v1337
    %1414 = vmatprep.subr.mxu0 0.0
    %1415 = vmatpush2.msra.mxu0 %v1336
    %1416 = vmatprep.subr.mxu0 0.0
    %1417 = vmatpush2.msra.mxu0 %v1335
    %1418 = vmatprep.subr.mxu0 0.0
    %1419 = vmatpush2.msra.mxu0 %v1334
    %1420 = vmatprep.mubr.f32.mxu0 %v1317
    %1421 = vmatmul.mubr.f32.gmra.mxu0 %v1316
    %v1422 = vpop.f32.mrf.mxu0
    %v1423 = vadd.f32 %v1354, %v1422
    %v1424 = vpop.f32.mrf.mxu0
    %1425 = vdwg.mxu0
    %v1426 = vmul.f32 %v1423, %v1423
    %v1427 = vsel %vm793, %v1426, 0.0
    %1428 = vadd.xlane.f32.xlu0 %v1427
    %v1429 = vpop.xlane.xlu0 %1428
    %v1430 = vmax.f32 %v1429, 1e-24
    %v1431 = vrsqrt.pop %v1430
    %v1432 = vmul.f32 %v1423, %v1431
    %1433 = vst [vmem:[#allocation2] sm:$0x3] %v1432
    // Predicated region
    $region22: #{contrastive_cnn_forward.1} parent=1 // pred_check
      _
    $region23: #{contrastive_cnn_forward.1} parent=1 // pred_check_branch
      %1435 = sbr.rel (0) target = $region25
    $region24: #{contrastive_cnn_forward.1} parent=1 // pred_region
      %s1437 = ssub.s32 32, 32
      %1438 = vsyncadd [#allocation3], %s1437
      %s1440 = sshll.u32 [#allocation2], 4
      %s1441 = int_to_ptr.vmem [resolvable:$true] %s1440
      %1443 = dma.vmem_to_hbm [thread:$0]  %s1441, 32, %s5, [#allocation3]
    $region25: #{contrastive_cnn_forward.1} parent=1 // pred_fallthru
      _
    // Predicated region
    $region26: #{contrastive_cnn_forward.1} parent=1 // pred_check
      _
    $region27: #{contrastive_cnn_forward.1} parent=1 // pred_check_branch
      %1445 = sbr.rel (0) target = $region29
    $region28: #{contrastive_cnn_forward.1} parent=1 // pred_region
      %1446 = dma.done [#allocation3], 32
    $region29: #{contrastive_cnn_forward.1} parent=1 // pred_fallthru
      _
    %1447 = vsyncpa [#allocation3], 1

</llo_original>
